<compile_context>
chip_gen: v7x
topology: tpu7x:2x2x1
jax: 0.10.0
libtpu: 0.0.40
codegen_flags: <defaults>
</compile_context>

<pallas_src>
import functools
import math

import jax
import jax.numpy as jnp
from jax import lax
from jax.experimental import pallas as pl
from jax.experimental.pallas import tpu as pltpu

LOG_STD_MAX = 2.0
LOG_STD_MIN = -20.0

_BLOCK_B_CAP = 4096  # rows; live footprint (<8 MiB) fits scoped-VMEM defaults on v5e/v6e/v7x


def _round_up(n, m):
    return ((n + m - 1) // m) * m


def _gelu(x, approximate):
    if approximate:
        # tanh approximation -> EUP slot (only use once DMA/overhead-bound regime is gone)
        return jax.nn.gelu(x, approximate=True)
    # PyTorch nn.GELU() default = exact erf formulation, computed in f32.
    return 0.5 * x * (1.0 + lax.erf(x * jnp.float32(1.0 / math.sqrt(2.0))))


def _num_tensorcores():
    """Best-effort TensorCore-per-chip count (2 on v7x / v4 / v5p, else 1)."""
    try:
        kind = jax.devices()[0].device_kind.lower()
    except Exception:
        return 1
    if ("v7" in kind) or ("v4" in kind) or ("v5p" in kind) or ("p5" in kind):
        return 2
    return 1


def _choose_block_b(B, num_cores, align, cap=_BLOCK_B_CAP):
    if num_cores >= 2 and B > align:
        # Even number of steps >= 2 so ("parallel",) balances both TensorCores.
        steps = max(2, 2 * pl.cdiv(B, 2 * cap))
        return min(cap, _round_up(pl.cdiv(B, steps), align))
    # Single-TC chips (v5e/v6e): grid is a serial loop -> one big step when it fits.
    return min(cap, _round_up(B, align))


def gaussian_mlp_kernel(x_ref, w1_ref, b1_ref, w2_ref, b2_ref,
                        wmu_ref, bmu_ref, wls_ref, bls_ref,
                        mu_ref, std_ref, *, approximate_gelu):
    mm_dtype = w1_ref.dtype  # bf16 by default, f32 optional

    # x arrives in f32; cast to the matmul dtype in-register (no wrapper-side cast op).
    x = x_ref[...].astype(mm_dtype)

    # latent_policy: Linear -> GELU -> Linear -> GELU  (MXU matmuls, f32 accumulate)
    h = jnp.dot(x, w1_ref[...], preferred_element_type=jnp.float32) + b1_ref[...]
    h = _gelu(h, approximate_gelu)
    h = jnp.dot(h.astype(mm_dtype), w2_ref[...],
                preferred_element_type=jnp.float32) + b2_ref[...]
    h = _gelu(h, approximate_gelu)
    h = h.astype(mm_dtype)

    # Heads (kept separate: matches PyTorch weights, narrow N is cheap on the MXU).
    mu = jnp.dot(h, wmu_ref[...], preferred_element_type=jnp.float32) + bmu_ref[...]
    log_std = jnp.dot(h, wls_ref[...], preferred_element_type=jnp.float32) + bls_ref[...]

    mu_ref[...] = mu.astype(mu_ref.dtype)
    std_ref[...] = jnp.exp(jnp.clip(log_std, LOG_STD_MIN, LOG_STD_MAX)).astype(std_ref.dtype)


def prepare_params(params, matmul_dtype=jnp.bfloat16):
    """One-time parameter preparation: cast weights to the matmul dtype (biases stay f32).

    Call once and cache the result; keeps the per-forward hot path free of weight casts.
    """
    w1, b1, w2, b2, wmu, bmu, wls, bls = params
    cast = lambda w: w.astype(matmul_dtype)
    return (cast(w1), b1, cast(w2), b2, cast(wmu), bmu, cast(wls), bls)


def gaussian_mlp_forward(x, prepared_params, *, block_b=None, approximate_gelu=False):
    """x: [B, in_size] float32. Returns (mu, std), each [B, out_size] float32."""
    B, in_size = x.shape
    w1, b1, w2, b2, wmu, bmu, wls, bls = prepared_params
    hidden = w1.shape[1]
    out_size = wmu.shape[1]
    mm_dtype = w1.dtype

    # ---- generation-aware batch tiling ----
    align = 16 if mm_dtype == jnp.bfloat16 else 8
    if block_b is None:
        block_b = _choose_block_b(B, _num_tensorcores(), align)
    Bp = _round_up(B, block_b)
    if Bp != B:
        x = jnp.pad(x, ((0, Bp - B), (0, 0)))

    full = lambda shape: pl.BlockSpec(shape, lambda i: (0, 0))  # grid-invariant weights

    mu, std = pl.pallas_call(
        functools.partial(gaussian_mlp_kernel, approximate_gelu=approximate_gelu),
        out_shape=(jax.ShapeDtypeStruct((Bp, out_size), jnp.float32),
                   jax.ShapeDtypeStruct((Bp, out_size), jnp.float32)),
        grid_spec=pltpu.PrefetchScalarGridSpec(
            num_scalar_prefetch=0,
            grid=(Bp // block_b,),
            in_specs=[
                pl.BlockSpec((block_b, in_size), lambda i: (i, 0)),  # x tile (f32)
                full((in_size, hidden)),   # w1
                full((1, hidden)),         # b1
                full((hidden, hidden)),    # w2
                full((1, hidden)),         # b2
                full((hidden, out_size)),  # w_mu
                full((1, out_size)),       # b_mu
                full((hidden, out_size)),  # w_log_std
                full((1, out_size)),       # b_log_std
            ],
            out_specs=[
                pl.BlockSpec((block_b, out_size), lambda i: (i, 0)),  # mu
                pl.BlockSpec((block_b, out_size), lambda i: (i, 0)),  # std
            ],
        ),
        compiler_params=pltpu.CompilerParams(
            dimension_semantics=("parallel",)),
    )(x, w1, b1, w2, b2, wmu, bmu, wls, bls)

    if Bp != B:
        mu = mu[:B]
        std = std[:B]
    return mu, std


def init_params(key, in_size, out_size, net_arch=(128, 128)):
    """Deterministic init mimicking PyTorch nn.Linear default (U(-1/sqrt(fan_in), +))."""
    dims = [in_size] + list(net_arch)
    params = []
    keys = jax.random.split(key, 2 * (len(net_arch) + 2))
    ki = 0

    def linear(fan_in, fan_out):
        nonlocal ki
        bound = 1.0 / math.sqrt(fan_in)
        w = jax.random.uniform(keys[ki], (fan_in, fan_out), jnp.float32, -bound, bound)
        b = jax.random.uniform(keys[ki + 1], (1, fan_out), jnp.float32, -bound, bound)
        ki += 2
        return w, b

    for a, b_dim in zip(dims[:-1], dims[1:]):
        w, b = linear(a, b_dim)
        params.extend([w, b])
    wmu, bmu = linear(net_arch[-1], out_size)
    wls, bls = linear(net_arch[-1], out_size)
    params.extend([wmu, bmu, wls, bls])
    return tuple(params)


def _reference_forward(x, params, mm_dtype):
    """Plain-JAX reference with the same matmul operand dtype as the kernel."""
    w1, b1, w2, b2, wmu, bmu, wls, bls = params
    d = lambda a, w: jnp.dot(a.astype(mm_dtype), w.astype(mm_dtype),
                             preferred_element_type=jnp.float32)
    h = jax.nn.gelu(d(x, w1) + b1, approximate=False)
    h = jax.nn.gelu(d(h, w2) + b2, approximate=False)
    mu = d(h, wmu) + bmu
    std = jnp.exp(jnp.clip(d(h, wls) + bls, LOG_STD_MIN, LOG_STD_MAX))
    return mu, std


if __name__ == "__main__":
    key = jax.random.PRNGKey(0)
    k_param, k_x = jax.random.split(key)

    B, in_size, out_size = 10, 16, 4   # ragged B exercises the padding path
    params = init_params(k_param, in_size, out_size, net_arch=(128, 128))
    x = jax.random.normal(k_x, (B, in_size), jnp.float32)

    # Default perf path: bf16 matmul operands, f32 accumulation + f32 elementwise math.
    prepared_bf16 = prepare_params(params, jnp.bfloat16)   # one-time, cache this
    mu, std = gaussian_mlp_forward(x, prepared_bf16)
    jax.block_until_ready((mu, std))
    assert mu.shape == (B, out_size) and std.shape == (B, out_size)
    # Tight check vs a bf16-operand JAX reference ...
    mu_refb, std_refb = _reference_forward(x, params, jnp.bfloat16)
    assert jnp.allclose(mu, mu_refb, atol=1e-3, rtol=1e-3)
    assert jnp.allclose(std, std_refb, atol=1e-3, rtol=1e-3)
    # ... and a loose bound vs the f32 ground truth (bf16 operand drift is bounded here).
    mu_ref32, std_ref32 = _reference_forward(x, params, jnp.float32)
    assert jnp.allclose(mu, mu_ref32, atol=3e-2, rtol=3e-2)
    assert jnp.allclose(std, std_ref32, atol=3e-2, rtol=3e-2)

    # Bit-faithful f32 path (matches the PyTorch f32 reference tightly).
    prepared_f32 = prepare_params(params, jnp.float32)
    mu32, std32 = gaussian_mlp_forward(x, prepared_f32)
    jax.block_until_ready((mu32, std32))
    assert jnp.allclose(mu32, mu_ref32, atol=1e-4, rtol=1e-4)
    assert jnp.allclose(std32, std_ref32, atol=1e-4, rtol=1e-4)

    # TODO(synk): the torch MultivariateDiagonalNormal distribution object has no Pallas
    # equivalent; the kernel returns its sufficient statistics (mu, std) instead.
    print("KERNEL_OK")
</pallas_src>

<mosaic_0001>
module attributes {stable_mosaic.version = 11 : i64} {
  func.func @gaussian_mlp_kernel(%arg0: i32, %arg1: memref<16x16xf32, #tpu.memory_space<vmem>>, %arg2: memref<16x128xbf16, #tpu.memory_space<vmem>>, %arg3: memref<1x128xf32, #tpu.memory_space<vmem>>, %arg4: memref<128x128xbf16, #tpu.memory_space<vmem>>, %arg5: memref<1x128xf32, #tpu.memory_space<vmem>>, %arg6: memref<128x4xbf16, #tpu.memory_space<vmem>>, %arg7: memref<1x4xf32, #tpu.memory_space<vmem>>, %arg8: memref<128x4xbf16, #tpu.memory_space<vmem>>, %arg9: memref<1x4xf32, #tpu.memory_space<vmem>>, %arg10: memref<16x4xf32, #tpu.memory_space<vmem>>, %arg11: memref<16x4xf32, #tpu.memory_space<vmem>>) attributes {dimension_semantics = [#tpu.dimension_semantics<parallel>], iteration_bounds = array<i64: 1>, scalar_prefetch = 0 : i64, scratch_operands = 0 : i64, tpu.core_type = #tpu.core_type<tc>, window_params = [{transform_indices = @transform_0, window_bounds = array<i64: 16, 16>}, {pipeline_mode = #tpu.pipeline_mode<synchronous>, transform_indices = @transform_1, window_bounds = array<i64: 16, 128>}, {pipeline_mode = #tpu.pipeline_mode<synchronous>, transform_indices = @transform_2, window_bounds = array<i64: 1, 128>}, {pipeline_mode = #tpu.pipeline_mode<synchronous>, transform_indices = @transform_3, window_bounds = array<i64: 128, 128>}, {pipeline_mode = #tpu.pipeline_mode<synchronous>, transform_indices = @transform_4, window_bounds = array<i64: 1, 128>}, {pipeline_mode = #tpu.pipeline_mode<synchronous>, transform_indices = @transform_5, window_bounds = array<i64: 128, 4>}, {pipeline_mode = #tpu.pipeline_mode<synchronous>, transform_indices = @transform_6, window_bounds = array<i64: 1, 4>}, {pipeline_mode = #tpu.pipeline_mode<synchronous>, transform_indices = @transform_7, window_bounds = array<i64: 128, 4>}, {pipeline_mode = #tpu.pipeline_mode<synchronous>, transform_indices = @transform_8, window_bounds = array<i64: 1, 4>}, {transform_indices = @transform_9, window_bounds = array<i64: 16, 4>}, {transform_indices = @transform_10, window_bounds = array<i64: 16, 4>}]} {
    %c0 = arith.constant 0 : index
    %c0_0 = arith.constant 0 : index
    %0 = vector.load %arg1[%c0, %c0_0] : memref<16x16xf32, #tpu.memory_space<vmem>>, vector<16x16xf32>
    %1 = arith.truncf %0 : vector<16x16xf32> to vector<16x16xbf16>
    %c0_1 = arith.constant 0 : index
    %c0_2 = arith.constant 0 : index
    %2 = vector.load %arg2[%c0_1, %c0_2] : memref<16x128xbf16, #tpu.memory_space<vmem>>, vector<16x128xbf16>
    %cst = arith.constant dense<0.000000e+00> : vector<16x128xf32>
    %3 = tpu.matmul %1, %2, %cst {dimension_numbers = #tpu.dot_dimension_numbers<[1], [0], [0], [1], [0, 0, 1, 1], [], []>} : vector<16x16xbf16>, vector<16x128xbf16>, vector<16x128xf32> -> vector<16x128xf32>
    %c0_3 = arith.constant 0 : index
    %c0_4 = arith.constant 0 : index
    %4 = vector.load %arg3[%c0_3, %c0_4] : memref<1x128xf32, #tpu.memory_space<vmem>>, vector<1x128xf32>
    %5 = vector.broadcast %4 : vector<1x128xf32> to vector<16x128xf32>
    %6 = arith.addf %3, %5 : vector<16x128xf32>
    %cst_5 = arith.constant 5.000000e-01 : f32
    %7 = vector.broadcast %cst_5 : f32 to vector<16x128xf32>
    %8 = arith.mulf %7, %6 : vector<16x128xf32>
    %cst_6 = arith.constant 0.707106769 : f32
    %9 = vector.broadcast %cst_6 : f32 to vector<16x128xf32>
    %10 = arith.mulf %6, %9 : vector<16x128xf32>
    %11 = math.erf %10 : vector<16x128xf32>
    %cst_7 = arith.constant 1.000000e+00 : f32
    %12 = vector.broadcast %cst_7 : f32 to vector<16x128xf32>
    %13 = arith.addf %12, %11 : vector<16x128xf32>
    %14 = arith.mulf %8, %13 : vector<16x128xf32>
    %15 = arith.truncf %14 : vector<16x128xf32> to vector<16x128xbf16>
    %c0_8 = arith.constant 0 : index
    %c0_9 = arith.constant 0 : index
    %16 = vector.load %arg4[%c0_8, %c0_9] : memref<128x128xbf16, #tpu.memory_space<vmem>>, vector<128x128xbf16>
    %cst_10 = arith.constant dense<0.000000e+00> : vector<16x128xf32>
    %17 = tpu.matmul %15, %16, %cst_10 {dimension_numbers = #tpu.dot_dimension_numbers<[1], [0], [0], [1], [0, 0, 1, 1], [], []>} : vector<16x128xbf16>, vector<128x128xbf16>, vector<16x128xf32> -> vector<16x128xf32>
    %c0_11 = arith.constant 0 : index
    %c0_12 = arith.constant 0 : index
    %18 = vector.load %arg5[%c0_11, %c0_12] : memref<1x128xf32, #tpu.memory_space<vmem>>, vector<1x128xf32>
    %19 = vector.broadcast %18 : vector<1x128xf32> to vector<16x128xf32>
    %20 = arith.addf %17, %19 : vector<16x128xf32>
    %cst_13 = arith.constant 5.000000e-01 : f32
    %21 = vector.broadcast %cst_13 : f32 to vector<16x128xf32>
    %22 = arith.mulf %21, %20 : vector<16x128xf32>
    %cst_14 = arith.constant 0.707106769 : f32
    %23 = vector.broadcast %cst_14 : f32 to vector<16x128xf32>
    %24 = arith.mulf %20, %23 : vector<16x128xf32>
    %25 = math.erf %24 : vector<16x128xf32>
    %cst_15 = arith.constant 1.000000e+00 : f32
    %26 = vector.broadcast %cst_15 : f32 to vector<16x128xf32>
    %27 = arith.addf %26, %25 : vector<16x128xf32>
    %28 = arith.mulf %22, %27 : vector<16x128xf32>
    %29 = arith.truncf %28 : vector<16x128xf32> to vector<16x128xbf16>
    %c0_16 = arith.constant 0 : index
    %c0_17 = arith.constant 0 : index
    %30 = vector.load %arg6[%c0_16, %c0_17] : memref<128x4xbf16, #tpu.memory_space<vmem>>, vector<128x4xbf16>
    %cst_18 = arith.constant dense<0.000000e+00> : vector<16x4xf32>
    %31 = tpu.matmul %29, %30, %cst_18 {dimension_numbers = #tpu.dot_dimension_numbers<[1], [0], [0], [1], [0, 0, 1, 1], [], []>} : vector<16x128xbf16>, vector<128x4xbf16>, vector<16x4xf32> -> vector<16x4xf32>
    %c0_19 = arith.constant 0 : index
    %c0_20 = arith.constant 0 : index
    %32 = vector.load %arg7[%c0_19, %c0_20] : memref<1x4xf32, #tpu.memory_space<vmem>>, vector<1x4xf32>
    %33 = vector.broadcast %32 : vector<1x4xf32> to vector<16x4xf32>
    %34 = arith.addf %31, %33 : vector<16x4xf32>
    %c0_21 = arith.constant 0 : index
    %c0_22 = arith.constant 0 : index
    %35 = vector.load %arg8[%c0_21, %c0_22] : memref<128x4xbf16, #tpu.memory_space<vmem>>, vector<128x4xbf16>
    %cst_23 = arith.constant dense<0.000000e+00> : vector<16x4xf32>
    %36 = tpu.matmul %29, %35, %cst_23 {dimension_numbers = #tpu.dot_dimension_numbers<[1], [0], [0], [1], [0, 0, 1, 1], [], []>} : vector<16x128xbf16>, vector<128x4xbf16>, vector<16x4xf32> -> vector<16x4xf32>
    %c0_24 = arith.constant 0 : index
    %c0_25 = arith.constant 0 : index
    %37 = vector.load %arg9[%c0_24, %c0_25] : memref<1x4xf32, #tpu.memory_space<vmem>>, vector<1x4xf32>
    %38 = vector.broadcast %37 : vector<1x4xf32> to vector<16x4xf32>
    %39 = arith.addf %36, %38 : vector<16x4xf32>
    %c0_26 = arith.constant 0 : index
    %c0_27 = arith.constant 0 : index
    %40 = vector.load %arg10[%c0_26, %c0_27] : memref<16x4xf32, #tpu.memory_space<vmem>>, vector<16x4xf32>
    tpu.vector_store %arg10[%c0_26, %c0_27], %34 {strides = array<i32>} : memref<16x4xf32, #tpu.memory_space<vmem>>, vector<16x4xf32>,
    %cst_28 = arith.constant -2.000000e+01 : f32
    %cst_29 = arith.constant 2.000000e+00 : f32
    %41 = vector.broadcast %cst_28 : f32 to vector<16x4xf32>
    %42 = arith.maximumf %41, %39 : vector<16x4xf32>
    %43 = vector.broadcast %cst_29 : f32 to vector<16x4xf32>
    %44 = arith.minimumf %43, %42 : vector<16x4xf32>
    %45 = math.exp %44 : vector<16x4xf32>
    %c0_30 = arith.constant 0 : index
    %c0_31 = arith.constant 0 : index
    %46 = vector.load %arg11[%c0_30, %c0_31] : memref<16x4xf32, #tpu.memory_space<vmem>>, vector<16x4xf32>
    tpu.vector_store %arg11[%c0_30, %c0_31], %45 {strides = array<i32>} : memref<16x4xf32, #tpu.memory_space<vmem>>, vector<16x4xf32>,
    return
  }
  func.func @transform_0(%arg0: i32) -> (i32, i32) {
    %c0_i32 = arith.constant 0 : i32
    %c0_i32_0 = arith.constant 0 : i32
    return %arg0, %c0_i32 : i32, i32
  }
  func.func @transform_1(%arg0: i32) -> (i32, i32) {
    %c0_i32 = arith.constant 0 : i32
    %c0_i32_0 = arith.constant 0 : i32
    %c0_i32_1 = arith.constant 0 : i32
    return %c0_i32, %c0_i32_0 : i32, i32
  }
  func.func @transform_2(%arg0: i32) -> (i32, i32) {
    %c0_i32 = arith.constant 0 : i32
    %c0_i32_0 = arith.constant 0 : i32
    %c0_i32_1 = arith.constant 0 : i32
    return %c0_i32, %c0_i32_0 : i32, i32
  }
  func.func @transform_3(%arg0: i32) -> (i32, i32) {
    %c0_i32 = arith.constant 0 : i32
    %c0_i32_0 = arith.constant 0 : i32
    %c0_i32_1 = arith.constant 0 : i32
    return %c0_i32, %c0_i32_0 : i32, i32
  }
  func.func @transform_4(%arg0: i32) -> (i32, i32) {
    %c0_i32 = arith.constant 0 : i32
    %c0_i32_0 = arith.constant 0 : i32
    %c0_i32_1 = arith.constant 0 : i32
    return %c0_i32, %c0_i32_0 : i32, i32
  }
  func.func @transform_5(%arg0: i32) -> (i32, i32) {
    %c0_i32 = arith.constant 0 : i32
    %c0_i32_0 = arith.constant 0 : i32
    %c0_i32_1 = arith.constant 0 : i32
    return %c0_i32, %c0_i32_0 : i32, i32
  }
  func.func @transform_6(%arg0: i32) -> (i32, i32) {
    %c0_i32 = arith.constant 0 : i32
    %c0_i32_0 = arith.constant 0 : i32
    %c0_i32_1 = arith.constant 0 : i32
    return %c0_i32, %c0_i32_0 : i32, i32
  }
  func.func @transform_7(%arg0: i32) -> (i32, i32) {
    %c0_i32 = arith.constant 0 : i32
    %c0_i32_0 = arith.constant 0 : i32
    %c0_i32_1 = arith.constant 0 : i32
    return %c0_i32, %c0_i32_0 : i32, i32
  }
  func.func @transform_8(%arg0: i32) -> (i32, i32) {
    %c0_i32 = arith.constant 0 : i32
    %c0_i32_0 = arith.constant 0 : i32
    %c0_i32_1 = arith.constant 0 : i32
    return %c0_i32, %c0_i32_0 : i32, i32
  }
  func.func @transform_9(%arg0: i32) -> (i32, i32) {
    %c0_i32 = arith.constant 0 : i32
    %c0_i32_0 = arith.constant 0 : i32
    return %arg0, %c0_i32 : i32, i32
  }
  func.func @transform_10(%arg0: i32) -> (i32, i32) {
    %c0_i32 = arith.constant 0 : i32
    %c0_i32_0 = arith.constant 0 : i32
    return %arg0, %c0_i32 : i32, i32
  }
}

</mosaic_0001>

<llo_original>
// kernel: tpu_custom_call.1
$region0: #{tpu_custom_call.1}
  #allocation0 [shape = 'u32[]', space=smem, size = 0x4, offset = 0x4, fixed_abs, tag = 'smem constant byte address 0x4 - core index']
  #allocation1 [shape = 'u32[144,128]{1,0:T(1,128)}', space=vmem, size = 0x12000, scoped, tag = 'internal scratch']
  %s0 = inlined_call_operand.vmem [shape: f32[16,16], index: 0, kind: input, shape index: {}]
  %s1 = inlined_call_operand.vmem [shape: bf16[16,128], index: 1, kind: input, shape index: {}]
  %s2 = inlined_call_operand.vmem [shape: f32[1,128], index: 2, kind: input, shape index: {}]
  %s3 = inlined_call_operand.vmem [shape: bf16[128,128], index: 3, kind: input, shape index: {}]
  %s4 = inlined_call_operand.vmem [shape: f32[1,128], index: 4, kind: input, shape index: {}]
  %s5 = inlined_call_operand.vmem [shape: bf16[128,4], index: 5, kind: input, shape index: {}]
  %s6 = inlined_call_operand.vmem [shape: f32[1,4], index: 6, kind: input, shape index: {}]
  %s7 = inlined_call_operand.vmem [shape: bf16[128,4], index: 7, kind: input, shape index: {}]
  %s8 = inlined_call_operand.vmem [shape: f32[1,4], index: 8, kind: input, shape index: {}]
  %s9 = inlined_call_operand.vmem [shape: f32[16,4], index: 9, kind: output, shape index: {0}]
  %s10 = inlined_call_operand.vmem [shape: f32[16,4], index: 10, kind: output, shape index: {1}]
  %11 = xla_tuple %s9, %s10
  %s12 = sld [smem:[#allocation0]]
  $region54: #{tpu_custom_call.1} parent=0
    _
  %s14 = ssub.s32 1, %s12
  %s15 = scalar_select 0, %s14, %s12
  // Predicated region
  $region2: #{tpu_custom_call.1} parent=0 // pred_check
    _
  $region3: #{tpu_custom_call.1} parent=0 // pred_check_branch
    %17 = sbr.rel (0) target = $region5
  $region4: #{tpu_custom_call.1} parent=0 // pred_region
    _
  $region5: #{tpu_custom_call.1} parent=0 // pred_fallthru
    _
  // Predicated region
  $region6: #{tpu_custom_call.1} parent=0 // pred_check
    _
  $region7: #{tpu_custom_call.1} parent=0 // pred_check_branch
    %19 = sbr.rel (0) target = $region9
  $region8: #{tpu_custom_call.1} parent=0 // pred_region
    _
  $region9: #{tpu_custom_call.1} parent=0 // pred_fallthru
    _
  // Predicated region
  $region10: #{tpu_custom_call.1} parent=0 // pred_check
    _
  $region11: #{tpu_custom_call.1} parent=0 // pred_check_branch
    %21 = sbr.rel (0) target = $region13
  $region12: #{tpu_custom_call.1} parent=0 // pred_region
    _
  $region13: #{tpu_custom_call.1} parent=0 // pred_fallthru
    _
  // Predicated region
  $region14: #{tpu_custom_call.1} parent=0 // pred_check
    _
  $region15: #{tpu_custom_call.1} parent=0 // pred_check_branch
    %23 = sbr.rel (0) target = $region17
  $region16: #{tpu_custom_call.1} parent=0 // pred_region
    _
  $region17: #{tpu_custom_call.1} parent=0 // pred_fallthru
    _
  // Predicated region
  $region18: #{tpu_custom_call.1} parent=0 // pred_check
    _
  $region19: #{tpu_custom_call.1} parent=0 // pred_check_branch
    %25 = sbr.rel (0) target = $region21
  $region20: #{tpu_custom_call.1} parent=0 // pred_region
    _
  $region21: #{tpu_custom_call.1} parent=0 // pred_fallthru
    _
  // Predicated region
  $region22: #{tpu_custom_call.1} parent=0 // pred_check
    _
  $region23: #{tpu_custom_call.1} parent=0 // pred_check_branch
    %27 = sbr.rel (0) target = $region25
  $region24: #{tpu_custom_call.1} parent=0 // pred_region
    _
  $region25: #{tpu_custom_call.1} parent=0 // pred_fallthru
    _
  // Predicated region
  $region26: #{tpu_custom_call.1} parent=0 // pred_check
    _
  $region27: #{tpu_custom_call.1} parent=0 // pred_check_branch
    %29 = sbr.rel (0) target = $region29
  $region28: #{tpu_custom_call.1} parent=0 // pred_region
    _
  $region29: #{tpu_custom_call.1} parent=0 // pred_fallthru
    _
  // Predicated region
  $region30: #{tpu_custom_call.1} parent=0 // pred_check
    _
  $region31: #{tpu_custom_call.1} parent=0 // pred_check_branch
    %31 = sbr.rel (0) target = $region33
  $region32: #{tpu_custom_call.1} parent=0 // pred_region
    _
  $region33: #{tpu_custom_call.1} parent=0 // pred_fallthru
    _
  // Predicated region
  $region34: #{tpu_custom_call.1} parent=0 // pred_check
    _
  $region35: #{tpu_custom_call.1} parent=0 // pred_check_branch
    %33 = sbr.rel (0) target = $region37
  $region36: #{tpu_custom_call.1} parent=0 // pred_region
    _
  $region37: #{tpu_custom_call.1} parent=0 // pred_fallthru
    _
  %v35 = vld [vmem:[%s0] sm:$0xff]
  %v36 = vld [vmem:[%s0 + $0x8] sm:$0xff]
  %v37 = vpack.c.bf16 %v36, %v35
  %v38 = vld [vmem:[%s1] sm:$0xf]
  %v39 = vld [vmem:[%s1 + $0x4] sm:$0xf]
  %v40 = vld [vmem:[%s2] sm:$0x1]
  %v42 = vlaneseq
  %v43 = vshrl.u32 %v42, 7
  %v44 = vsub.s32 0, %v43
  %v45 = vrot.slane %v40, %v44
  %v49 = vunpack.c.l.b16 %v38
  %v50 = vunpack.c.l.b16 %v39
  %v51 = vpack.c.b16 %v50, %v49
  %vm53 = vcmask 130048
  %v55 = vsel %vm53, %v37, 0
  %57 = vmatprep.subr.bf16.mxu0 0
  %58 = vmatpush1.bf16.msra.mxu0 %v51
  %59 = vmatprep.subr.bf16.mxu0 0
  %60 = vmatpush1.bf16.msra.mxu0 0
  %61 = vmatprep.subr.bf16.mxu0 0
  %62 = vmatpush1.bf16.msra.mxu0 0
  %63 = vmatprep.subr.bf16.mxu0 0
  %64 = vmatpush1.bf16.msra.mxu0 0
  %65 = vmatprep.subr.bf16.mxu0 0
  %66 = vmatpush1.bf16.msra.mxu0 0
  %67 = vmatprep.subr.bf16.mxu0 0
  %68 = vmatpush1.bf16.msra.mxu0 0
  %69 = vmatprep.subr.bf16.mxu0 0
  %70 = vmatpush1.bf16.msra.mxu0 0
  %71 = vmatprep.subr.bf16.mxu0 0
  %72 = vmatpush1.bf16.msra.mxu0 0
  %73 = vmatprep.subr.bf16.mxu0 0
  %74 = vmatpush1.bf16.msra.mxu0 0
  %75 = vmatprep.subr.bf16.mxu0 0
  %76 = vmatpush1.bf16.msra.mxu0 0
  %77 = vmatprep.subr.bf16.mxu0 0
  %78 = vmatpush1.bf16.msra.mxu0 0
  %79 = vmatprep.subr.bf16.mxu0 0
  %80 = vmatpush1.bf16.msra.mxu0 0
  %81 = vmatprep.subr.bf16.mxu0 0
  %82 = vmatpush1.bf16.msra.mxu0 0
  %83 = vmatprep.subr.bf16.mxu0 0
  %84 = vmatpush1.bf16.msra.mxu0 0
  %85 = vmatprep.subr.bf16.mxu0 0
  %86 = vmatpush1.bf16.msra.mxu0 0
  %87 = vmatprep.subr.bf16.mxu0 0
  %88 = vmatpush1.bf16.msra.mxu0 0
  %89 = vmatprep.mubr.bf16.mxu0 0
  %90 = vmatmul.mubr.bf16.gmra.mrb[0].mxu0 %v55
  %v91 = vpop.f32.mrb[0].mxu0
  %v92 = vadd.f32 %v45, %v91
  %v93 = vpop.f32.mrb[0].mxu0
  %v94 = vpop.f32.mrb[0].mxu0
  %v95 = vadd.f32 %v45, %v94
  %v96 = vpop.f32.mrb[0].mxu0
  %97 = vdwg.mxu0
  %v98 = vmul.f32 %v92, 0.5
  %v99 = vmul.f32 %v95, 0.5
  %v100 = vmul.f32 %v92, 0.70710677
  %v101 = vmul.f32 %v95, 0.70710677
  %v102 = verf.f32.pop %v100
  %v103 = verf.f32.pop %v101
  %v104 = vadd.f32 %v102, 1.0
  %v105 = vadd.f32 %v103, 1.0
  %v106 = vmul.f32 %v98, %v104
  %v107 = vmul.f32 %v99, %v105
  %v108 = vpack.c.bf16 %v107, %v106
  %v109 = vld [vmem:[%s3] sm:$0xf]
  %v110 = vld [vmem:[%s3 + $0x4] sm:$0xf]
  %v111 = vld [vmem:[%s3 + $0x8] sm:$0xf]
  %v112 = vld [vmem:[%s3 + $0xc] sm:$0xf]
  %v113 = vld [vmem:[%s3 + $0x10] sm:$0xf]
  %v114 = vld [vmem:[%s3 + $0x14] sm:$0xf]
  %v115 = vld [vmem:[%s3 + $0x18] sm:$0xf]
  %v116 = vld [vmem:[%s3 + $0x1c] sm:$0xf]
  %v117 = vld [vmem:[%s3 + $0x20] sm:$0xf]
  %v118 = vld [vmem:[%s3 + $0x24] sm:$0xf]
  %v119 = vld [vmem:[%s3 + $0x28] sm:$0xf]
  %v120 = vld [vmem:[%s3 + $0x2c] sm:$0xf]
  %v121 = vld [vmem:[%s3 + $0x30] sm:$0xf]
  %v122 = vld [vmem:[%s3 + $0x34] sm:$0xf]
  %v123 = vld [vmem:[%s3 + $0x38] sm:$0xf]
  %v124 = vld [vmem:[%s3 + $0x3c] sm:$0xf]
  %v125 = vld [vmem:[%s4] sm:$0x1]
  %v127 = vlaneseq
  %v128 = vshrl.u32 %v127, 7
  %v129 = vsub.s32 0, %v128
  %v130 = vrot.slane %v125, %v129
  %v148 = vunpack.c.l.b16 %v109
  %v149 = vunpack.c.l.b16 %v110
  %v150 = vunpack.c.l.b16 %v111
  %v151 = vunpack.c.l.b16 %v112
  %v152 = vunpack.c.l.b16 %v113
  %v153 = vunpack.c.l.b16 %v114
  %v154 = vunpack.c.l.b16 %v115
  %v155 = vunpack.c.l.b16 %v116
  %v156 = vunpack.c.l.b16 %v117
  %v157 = vunpack.c.l.b16 %v118
  %v158 = vunpack.c.l.b16 %v119
  %v159 = vunpack.c.l.b16 %v120
  %v160 = vunpack.c.l.b16 %v121
  %v161 = vunpack.c.l.b16 %v122
  %v162 = vunpack.c.l.b16 %v123
  %v163 = vunpack.c.l.b16 %v124
  %v164 = vpack.c.b16 %v149, %v148
  %v165 = vpack.c.b16 %v151, %v150
  %v166 = vpack.c.b16 %v153, %v152
  %v167 = vpack.c.b16 %v155, %v154
  %v168 = vpack.c.b16 %v157, %v156
  %v169 = vpack.c.b16 %v159, %v158
  %v170 = vpack.c.b16 %v161, %v160
  %v171 = vpack.c.b16 %v163, %v162
  %180 = vmatprep.subr.bf16.mxu0 0
  %181 = vmatpush1.bf16.msra.mxu0 %v164
  %182 = vmatprep.subr.bf16.mxu0 0
  %183 = vmatpush1.bf16.msra.mxu0 %v165
  %184 = vmatprep.subr.bf16.mxu0 0
  %185 = vmatpush1.bf16.msra.mxu0 %v166
  %186 = vmatprep.subr.bf16.mxu0 0
  %187 = vmatpush1.bf16.msra.mxu0 %v167
  %188 = vmatprep.subr.bf16.mxu0 0
  %189 = vmatpush1.bf16.msra.mxu0 %v168
  %190 = vmatprep.subr.bf16.mxu0 0
  %191 = vmatpush1.bf16.msra.mxu0 %v169
  %192 = vmatprep.subr.bf16.mxu0 0
  %193 = vmatpush1.bf16.msra.mxu0 %v170
  %194 = vmatprep.subr.bf16.mxu0 0
  %195 = vmatpush1.bf16.msra.mxu0 %v171
  %196 = vmatprep.subr.bf16.mxu0 0
  %197 = vmatpush1.bf16.msra.mxu0 0
  %198 = vmatprep.subr.bf16.mxu0 0
  %199 = vmatpush1.bf16.msra.mxu0 0
  %200 = vmatprep.subr.bf16.mxu0 0
  %201 = vmatpush1.bf16.msra.mxu0 0
  %202 = vmatprep.subr.bf16.mxu0 0
  %203 = vmatpush1.bf16.msra.mxu0 0
  %204 = vmatprep.subr.bf16.mxu0 0
  %205 = vmatpush1.bf16.msra.mxu0 0
  %206 = vmatprep.subr.bf16.mxu0 0
  %207 = vmatpush1.bf16.msra.mxu0 0
  %208 = vmatprep.subr.bf16.mxu0 0
  %209 = vmatpush1.bf16.msra.mxu0 0
  %210 = vmatprep.subr.bf16.mxu0 0
  %211 = vmatpush1.bf16.msra.mxu0 0
  %212 = vmatprep.mubr.bf16.mxu0 0
  %213 = vmatmul.mubr.bf16.gmra.mrb[0].mxu0 %v108
  %v214 = vpop.f32.mrb[0].mxu0
  %v215 = vadd.f32 %v130, %v214
  %v216 = vpop.f32.mrb[0].mxu0
  %v217 = vpop.f32.mrb[0].mxu0
  %v218 = vadd.f32 %v130, %v217
  %v219 = vpop.f32.mrb[0].mxu0
  %220 = vdwg.mxu0
  %v221 = vmul.f32 %v215, 0.5
  %v222 = vmul.f32 %v218, 0.5
  %v223 = vmul.f32 %v215, 0.70710677
  %v224 = vmul.f32 %v218, 0.70710677
  %v225 = verf.f32.pop %v223
  %v226 = verf.f32.pop %v224
  %v227 = vadd.f32 %v225, 1.0
  %v228 = vadd.f32 %v226, 1.0
  %v229 = vmul.f32 %v221, %v227
  %v230 = vmul.f32 %v222, %v228
  %v231 = vpack.c.bf16 %v230, %v229
  %v232 = vld [vmem:[%s5] sm:$0xf]
  %v233 = vld [vmem:[%s5 + $0x4] sm:$0xf]
  %v234 = vld [vmem:[%s5 + $0x8] sm:$0xf]
  %v235 = vld [vmem:[%s5 + $0xc] sm:$0xf]
  %v236 = vld [vmem:[%s5 + $0x10] sm:$0xf]
  %v237 = vld [vmem:[%s5 + $0x14] sm:$0xf]
  %v238 = vld [vmem:[%s5 + $0x18] sm:$0xf]
  %v239 = vld [vmem:[%s5 + $0x1c] sm:$0xf]
  %v240 = vld [vmem:[%s5 + $0x20] sm:$0xf]
  %v241 = vld [vmem:[%s5 + $0x24] sm:$0xf]
  %v242 = vld [vmem:[%s5 + $0x28] sm:$0xf]
  %v243 = vld [vmem:[%s5 + $0x2c] sm:$0xf]
  %v244 = vld [vmem:[%s5 + $0x30] sm:$0xf]
  %v245 = vld [vmem:[%s5 + $0x34] sm:$0xf]
  %v246 = vld [vmem:[%s5 + $0x38] sm:$0xf]
  %v247 = vld [vmem:[%s5 + $0x3c] sm:$0xf]
  %v248 = vld [vmem:[%s6] sm:$0x1]
  %v250 = vlaneseq
  %v251 = vshrl.u32 %v250, 7
  %v252 = vsub.s32 0, %v251
  %v253 = vrot.slane %v248, %v252
  %v271 = vunpack.c.l.b16 %v232
  %v272 = vunpack.c.l.b16 %v233
  %v273 = vunpack.c.l.b16 %v234
  %v274 = vunpack.c.l.b16 %v235
  %v275 = vunpack.c.l.b16 %v236
  %v276 = vunpack.c.l.b16 %v237
  %v277 = vunpack.c.l.b16 %v238
  %v278 = vunpack.c.l.b16 %v239
  %v279 = vunpack.c.l.b16 %v240
  %v280 = vunpack.c.l.b16 %v241
  %v281 = vunpack.c.l.b16 %v242
  %v282 = vunpack.c.l.b16 %v243
  %v283 = vunpack.c.l.b16 %v244
  %v284 = vunpack.c.l.b16 %v245
  %v285 = vunpack.c.l.b16 %v246
  %v286 = vunpack.c.l.b16 %v247
  %v287 = vpack.c.b16 %v272, %v271
  %v288 = vpack.c.b16 %v274, %v273
  %v289 = vpack.c.b16 %v276, %v275
  %v290 = vpack.c.b16 %v278, %v277
  %v291 = vpack.c.b16 %v280, %v279
  %v292 = vpack.c.b16 %v282, %v281
  %v293 = vpack.c.b16 %v284, %v283
  %v294 = vpack.c.b16 %v286, %v285
  %303 = vmatprep.subr.bf16.mxu0 0
  %304 = vmatpush1.bf16.msra.mxu0 %v287
  %305 = vmatprep.subr.bf16.mxu0 0
  %306 = vmatpush1.bf16.msra.mxu0 %v288
  %307 = vmatprep.subr.bf16.mxu0 0
  %308 = vmatpush1.bf16.msra.mxu0 %v289
  %309 = vmatprep.subr.bf16.mxu0 0
  %310 = vmatpush1.bf16.msra.mxu0 %v290
  %311 = vmatprep.subr.bf16.mxu0 0
  %312 = vmatpush1.bf16.msra.mxu0 %v291
  %313 = vmatprep.subr.bf16.mxu0 0
  %314 = vmatpush1.bf16.msra.mxu0 %v292
  %315 = vmatprep.subr.bf16.mxu0 0
  %316 = vmatpush1.bf16.msra.mxu0 %v293
  %317 = vmatprep.subr.bf16.mxu0 0
  %318 = vmatpush1.bf16.msra.mxu0 %v294
  %319 = vmatprep.subr.bf16.mxu0 0
  %320 = vmatpush1.bf16.msra.mxu0 0
  %321 = vmatprep.subr.bf16.mxu0 0
  %322 = vmatpush1.bf16.msra.mxu0 0
  %323 = vmatprep.subr.bf16.mxu0 0
  %324 = vmatpush1.bf16.msra.mxu0 0
  %325 = vmatprep.subr.bf16.mxu0 0
  %326 = vmatpush1.bf16.msra.mxu0 0
  %327 = vmatprep.subr.bf16.mxu0 0
  %328 = vmatpush1.bf16.msra.mxu0 0
  %329 = vmatprep.subr.bf16.mxu0 0
  %330 = vmatpush1.bf16.msra.mxu0 0
  %331 = vmatprep.subr.bf16.mxu0 0
  %332 = vmatpush1.bf16.msra.mxu0 0
  %333 = vmatprep.subr.bf16.mxu0 0
  %334 = vmatpush1.bf16.msra.mxu0 0
  %335 = vmatprep.mubr.bf16.mxu0 0
  %336 = vmatmul.mubr.bf16.gmra.mrb[0].mxu0 %v231
  %v337 = vpop.f32.mrb[0].mxu0
  %v338 = vadd.f32 %v253, %v337
  %v339 = vpop.f32.mrb[0].mxu0
  %v340 = vpop.f32.mrb[0].mxu0
  %v341 = vadd.f32 %v253, %v340
  %v342 = vpop.f32.mrb[0].mxu0
  %343 = vdwg.mxu0
  %v344 = vld [vmem:[%s7] sm:$0xf]
  %v345 = vld [vmem:[%s7 + $0x4] sm:$0xf]
  %v346 = vld [vmem:[%s7 + $0x8] sm:$0xf]
  %v347 = vld [vmem:[%s7 + $0xc] sm:$0xf]
  %v348 = vld [vmem:[%s7 + $0x10] sm:$0xf]
  %v349 = vld [vmem:[%s7 + $0x14] sm:$0xf]
  %v350 = vld [vmem:[%s7 + $0x18] sm:$0xf]
  %v351 = vld [vmem:[%s7 + $0x1c] sm:$0xf]
  %v352 = vld [vmem:[%s7 + $0x20] sm:$0xf]
  %v353 = vld [vmem:[%s7 + $0x24] sm:$0xf]
  %v354 = vld [vmem:[%s7 + $0x28] sm:$0xf]
  %v355 = vld [vmem:[%s7 + $0x2c] sm:$0xf]
  %v356 = vld [vmem:[%s7 + $0x30] sm:$0xf]
  %v357 = vld [vmem:[%s7 + $0x34] sm:$0xf]
  %v358 = vld [vmem:[%s7 + $0x38] sm:$0xf]
  %v359 = vld [vmem:[%s7 + $0x3c] sm:$0xf]
  %v360 = vld [vmem:[%s8] sm:$0x1]
  %v362 = vlaneseq
  %v363 = vshrl.u32 %v362, 7
  %v364 = vsub.s32 0, %v363
  %v365 = vrot.slane %v360, %v364
  %v383 = vunpack.c.l.b16 %v344
  %v384 = vunpack.c.l.b16 %v345
  %v385 = vunpack.c.l.b16 %v346
  %v386 = vunpack.c.l.b16 %v347
  %v387 = vunpack.c.l.b16 %v348
  %v388 = vunpack.c.l.b16 %v349
  %v389 = vunpack.c.l.b16 %v350
  %v390 = vunpack.c.l.b16 %v351
  %v391 = vunpack.c.l.b16 %v352
  %v392 = vunpack.c.l.b16 %v353
  %v393 = vunpack.c.l.b16 %v354
  %v394 = vunpack.c.l.b16 %v355
  %v395 = vunpack.c.l.b16 %v356
  %v396 = vunpack.c.l.b16 %v357
  %v397 = vunpack.c.l.b16 %v358
  %v398 = vunpack.c.l.b16 %v359
  %v399 = vpack.c.b16 %v384, %v383
  %v400 = vpack.c.b16 %v386, %v385
  %v401 = vpack.c.b16 %v388, %v387
  %v402 = vpack.c.b16 %v390, %v389
  %v403 = vpack.c.b16 %v392, %v391
  %v404 = vpack.c.b16 %v394, %v393
  %v405 = vpack.c.b16 %v396, %v395
  %v406 = vpack.c.b16 %v398, %v397
  %415 = vmatprep.subr.bf16.mxu0 0
  %416 = vmatpush1.bf16.msra.mxu0 %v399
  %417 = vmatprep.subr.bf16.mxu0 0
  %418 = vmatpush1.bf16.msra.mxu0 %v400
  %419 = vmatprep.subr.bf16.mxu0 0
  %420 = vmatpush1.bf16.msra.mxu0 %v401
  %421 = vmatprep.subr.bf16.mxu0 0
  %422 = vmatpush1.bf16.msra.mxu0 %v402
  %423 = vmatprep.subr.bf16.mxu0 0
  %424 = vmatpush1.bf16.msra.mxu0 %v403
  %425 = vmatprep.subr.bf16.mxu0 0
  %426 = vmatpush1.bf16.msra.mxu0 %v404
  %427 = vmatprep.subr.bf16.mxu0 0
  %428 = vmatpush1.bf16.msra.mxu0 %v405
  %429 = vmatprep.subr.bf16.mxu0 0
  %430 = vmatpush1.bf16.msra.mxu0 %v406
  %431 = vmatprep.subr.bf16.mxu0 0
  %432 = vmatpush1.bf16.msra.mxu0 0
  %433 = vmatprep.subr.bf16.mxu0 0
  %434 = vmatpush1.bf16.msra.mxu0 0
  %435 = vmatprep.subr.bf16.mxu0 0
  %436 = vmatpush1.bf16.msra.mxu0 0
  %437 = vmatprep.subr.bf16.mxu0 0
  %438 = vmatpush1.bf16.msra.mxu0 0
  %439 = vmatprep.subr.bf16.mxu0 0
  %440 = vmatpush1.bf16.msra.mxu0 0
  %441 = vmatprep.subr.bf16.mxu0 0
  %442 = vmatpush1.bf16.msra.mxu0 0
  %443 = vmatprep.subr.bf16.mxu0 0
  %444 = vmatpush1.bf16.msra.mxu0 0
  %445 = vmatprep.subr.bf16.mxu0 0
  %446 = vmatpush1.bf16.msra.mxu0 0
  %447 = vmatprep.mubr.bf16.mxu0 0
  %448 = vmatmul.mubr.bf16.gmra.mrb[0].mxu0 %v231
  %v449 = vpop.f32.mrb[0].mxu0
  %v450 = vadd.f32 %v365, %v449
  %v451 = vpop.f32.mrb[0].mxu0
  %v452 = vpop.f32.mrb[0].mxu0
  %v453 = vadd.f32 %v365, %v452
  %v454 = vpop.f32.mrb[0].mxu0
  %455 = vdwg.mxu0
  %vm456 = vcmask 31744
  %457 = vst.msk [vmem:[%s9] sm:$0xff] %vm456, %v338
  %458 = vst.msk [vmem:[%s9 + $0x8] sm:$0xff] %vm456, %v341
  %v459 = vmax.f32 %v450, -20.0
  %v460 = vmax.f32 %v453, -20.0
  %v461 = vmin.f32 %v459, 2.0
  %v462 = vmin.f32 %v460, 2.0
  %v463 = vmul.f32 %v461, 1.442695
  %v464 = vpow.pop %v463
  %v465 = vmul.f32 %v462, 1.442695
  %v466 = vpow.pop %v465
  %467 = vst.msk [vmem:[%s10] sm:$0xff] %vm456, %v464
  %468 = vst.msk [vmem:[%s10 + $0x8] sm:$0xff] %vm456, %v466
  // Predicated region
  $region38: #{tpu_custom_call.1} parent=0 // pred_check
    _
  $region39: #{tpu_custom_call.1} parent=0 // pred_check_branch
    %470 = sbr.rel (0) target = $region41
  $region40: #{tpu_custom_call.1} parent=0 // pred_region
    _
  $region41: #{tpu_custom_call.1} parent=0 // pred_fallthru
    _
  // Predicated region
  $region42: #{tpu_custom_call.1} parent=0 // pred_check
    _
  $region43: #{tpu_custom_call.1} parent=0 // pred_check_branch
    %472 = sbr.rel (0) target = $region45
  $region44: #{tpu_custom_call.1} parent=0 // pred_region
    _
  $region45: #{tpu_custom_call.1} parent=0 // pred_fallthru
    _
  // Predicated region
  $region46: #{tpu_custom_call.1} parent=0 // pred_check
    _
  $region47: #{tpu_custom_call.1} parent=0 // pred_check_branch
    %474 = sbr.rel (0) target = $region49
  $region48: #{tpu_custom_call.1} parent=0 // pred_region
    _
  $region49: #{tpu_custom_call.1} parent=0 // pred_fallthru
    _
  // Predicated region
  $region50: #{tpu_custom_call.1} parent=0 // pred_check
    _
  $region51: #{tpu_custom_call.1} parent=0 // pred_check_branch
    %476 = sbr.rel (0) target = $region53
  $region52: #{tpu_custom_call.1} parent=0 // pred_region
    _
  $region53: #{tpu_custom_call.1} parent=0 // pred_fallthru
    _

</llo_original>
